<compile_context>
chip_gen: v5e
topology: v5e:2x2
jax: 0.10.0
libtpu: 0.0.40
codegen_flags: <defaults>
</compile_context>

<pallas_src>
import jax
import jax.numpy as jnp
from jax.experimental import pallas as pl
from jax.experimental.pallas import tpu as pltpu

IN_SZ = 784
LAYERS = (256, 128, 64)
OUT_SZ = 10

_LANE = 128


def _round_up(n, m):
    return (n + m - 1) // m * m


# Lane-aligned (padded) feature dims used inside the kernel.
IN_PAD = _round_up(IN_SZ, _LANE)       # 896
L1_PAD = _round_up(LAYERS[0], _LANE)   # 256
L2_PAD = _round_up(LAYERS[1], _LANE)   # 128
L3_PAD = _round_up(LAYERS[2], _LANE)   # 128
OUT_PAD = _round_up(OUT_SZ, _LANE)     # 128


def mlp_kernel(x_ref, w1_ref, b1_ref, w2_ref, b2_ref, w3_ref, b3_ref,
               w4_ref, b4_ref, out_ref):
    # x and weights are bf16; every matmul accumulates in f32 on the MXU.
    x = x_ref[...]

    h = jnp.dot(x, w1_ref[...], preferred_element_type=jnp.float32) + b1_ref[...]
    h = jnp.maximum(h, 0.0).astype(jnp.bfloat16)

    h = jnp.dot(h, w2_ref[...], preferred_element_type=jnp.float32) + b2_ref[...]
    h = jnp.maximum(h, 0.0).astype(jnp.bfloat16)

    h = jnp.dot(h, w3_ref[...], preferred_element_type=jnp.float32) + b3_ref[...]
    h = jnp.maximum(h, 0.0).astype(jnp.bfloat16)

    logits = jnp.dot(h, w4_ref[...], preferred_element_type=jnp.float32) + b4_ref[...]

    # Padded logit columns (>= OUT_SZ) are garbage (zero weights/bias); exclude
    # them from the log-softmax reduction by masking to -inf.
    col = jax.lax.broadcasted_iota(jnp.int32, logits.shape, 1)
    logits = jnp.where(col < OUT_SZ, logits, -jnp.inf)

    # Numerically stable log-softmax along the last axis.
    m = jnp.max(logits, axis=-1, keepdims=True)
    shifted = logits - m
    lse = jnp.log(jnp.sum(jnp.exp(shifted), axis=-1, keepdims=True))
    out_ref[...] = (shifted - lse).astype(out_ref.dtype)


def _pad_params(params):
    """Zero-pad weights/biases to lane-aligned shapes; weights -> bf16, biases -> f32."""
    dims_in = (IN_SZ,) + LAYERS
    dims_out = LAYERS + (OUT_SZ,)
    pad_in = (IN_PAD, L1_PAD, L2_PAD, L3_PAD)
    pad_out = (L1_PAD, L2_PAD, L3_PAD, OUT_PAD)
    ws, bs = [], []
    for li in range(4):
        w = params[f"w{li + 1}"]
        b = params[f"b{li + 1}"]
        wp = jnp.zeros((pad_in[li], pad_out[li]), jnp.bfloat16)
        wp = wp.at[:dims_in[li], :dims_out[li]].set(w.astype(jnp.bfloat16))
        bp = jnp.zeros((1, pad_out[li]), jnp.float32)
        bp = bp.at[:, :dims_out[li]].set(b.astype(jnp.float32))
        ws.append(wp)
        bs.append(bp)
    return ws, bs


def mlp_forward(x, params, *, batch_tile=512):
    """x: [B, IN_SZ] float32. params: dict of w1..w4 (in,out) and b1..b4 (1,out)."""
    B, F = x.shape
    assert F == IN_SZ

    # Large tile for MXU M-occupancy, but capped at the (8-aligned) padded batch
    # so small batches run a single grid step. Tile is always a multiple of 8.
    bt = min(batch_tile, _round_up(B, 8))
    B_pad = _round_up(B, bt)

    # Zero-pad batch rows and input features; cast activations to bf16.
    # (Padded w1 rows are zero, so padded feature columns contribute nothing.)
    x_p = jnp.zeros((B_pad, IN_PAD), jnp.bfloat16)
    x_p = x_p.at[:B, :IN_SZ].set(x.astype(jnp.bfloat16))

    ws, bs = _pad_params(params)

    grid = (B_pad // bt,)

    def full_spec(arr):
        # Constant block index -> weights/biases stay resident across grid steps.
        return pl.BlockSpec(arr.shape, lambda i: (0, 0))

    out = pl.pallas_call(
        mlp_kernel,
        out_shape=jax.ShapeDtypeStruct((B_pad, OUT_PAD), jnp.float32),
        grid_spec=pltpu.PrefetchScalarGridSpec(
            num_scalar_prefetch=0,
            grid=grid,
            in_specs=[
                pl.BlockSpec((bt, IN_PAD), lambda i: (i, 0)),
                full_spec(ws[0]), full_spec(bs[0]),
                full_spec(ws[1]), full_spec(bs[1]),
                full_spec(ws[2]), full_spec(bs[2]),
                full_spec(ws[3]), full_spec(bs[3]),
            ],
            out_specs=pl.BlockSpec((bt, OUT_PAD), lambda i: (i, 0)),
        ),
        compiler_params=pltpu.CompilerParams(
            dimension_semantics=("parallel",)),
    )(x_p, ws[0], bs[0], ws[1], bs[1], ws[2], bs[2], ws[3], bs[3])

    return out[:B, :OUT_SZ]


def init_params(key):
    """Deterministic init mimicking nn.Linear default: U(-1/sqrt(fan_in), 1/sqrt(fan_in))."""
    dims = (IN_SZ,) + LAYERS + (OUT_SZ,)
    params = {}
    keys = jax.random.split(key, 2 * (len(dims) - 1))
    for li in range(len(dims) - 1):
        fan_in, fan_out = dims[li], dims[li + 1]
        bound = 1.0 / jnp.sqrt(fan_in)
        wk, bk = keys[2 * li], keys[2 * li + 1]
        params[f"w{li + 1}"] = jax.random.uniform(
            wk, (fan_in, fan_out), jnp.float32, -bound, bound)
        params[f"b{li + 1}"] = jax.random.uniform(
            bk, (1, fan_out), jnp.float32, -bound, bound)
    return params


def mlp_reference(x, params):
    """Reference with the same bf16-operand / f32-accumulate matmul math."""
    h = x
    for li in range(1, 4):
        w = params[f"w{li}"].astype(jnp.bfloat16)
        h = jnp.dot(h.astype(jnp.bfloat16), w,
                    preferred_element_type=jnp.float32) + params[f"b{li}"]
        h = jnp.maximum(h, 0.0)
    logits = jnp.dot(h.astype(jnp.bfloat16),
                     params["w4"].astype(jnp.bfloat16),
                     preferred_element_type=jnp.float32) + params["b4"]
    return jax.nn.log_softmax(logits, axis=1)


if __name__ == "__main__":
    key = jax.random.PRNGKey(0)
    pkey, xkey, xkey2 = jax.random.split(key, 3)
    params = init_params(pkey)

    # Small demo batch: single grid step (tile capped at padded batch).
    batch = 16
    x = jax.random.normal(xkey, (batch, IN_SZ), jnp.float32)
    out = jax.block_until_ready(mlp_forward(x, params))
    ref = mlp_reference(x, params)
    assert out.shape == (batch, OUT_SZ)
    assert jnp.allclose(out, ref, atol=2e-2, rtol=2e-2), "mismatch vs JAX reference"

    # Ragged batch: exercises batch padding + multi-step grid (20 -> pad 24, 3 tiles).
    batch2 = 20
    x2 = jax.random.normal(xkey2, (batch2, IN_SZ), jnp.float32)
    out2 = jax.block_until_ready(mlp_forward(x2, params, batch_tile=8))
    ref2 = mlp_reference(x2, params)
    assert out2.shape == (batch2, OUT_SZ)
    assert jnp.allclose(out2, ref2, atol=2e-2, rtol=2e-2), "mismatch vs JAX reference (ragged)"

    print("KERNEL_OK")
</pallas_src>

<mosaic_0001>
module attributes {stable_mosaic.version = 11 : i64} {
  func.func @mlp_kernel(%arg0: i32, %arg1: memref<16x896xbf16, #tpu.memory_space<vmem>>, %arg2: memref<896x256xbf16, #tpu.memory_space<vmem>>, %arg3: memref<1x256xf32, #tpu.memory_space<vmem>>, %arg4: memref<256x128xbf16, #tpu.memory_space<vmem>>, %arg5: memref<1x128xf32, #tpu.memory_space<vmem>>, %arg6: memref<128x128xbf16, #tpu.memory_space<vmem>>, %arg7: memref<1x128xf32, #tpu.memory_space<vmem>>, %arg8: memref<128x128xbf16, #tpu.memory_space<vmem>>, %arg9: memref<1x128xf32, #tpu.memory_space<vmem>>, %arg10: memref<16x128xf32, #tpu.memory_space<vmem>>) attributes {dimension_semantics = [#tpu.dimension_semantics<parallel>], iteration_bounds = array<i64: 1>, scalar_prefetch = 0 : i64, scratch_operands = 0 : i64, tpu.core_type = #tpu.core_type<tc>, window_params = [{transform_indices = @transform_0, window_bounds = array<i64: 16, 896>}, {pipeline_mode = #tpu.pipeline_mode<synchronous>, transform_indices = @transform_1, window_bounds = array<i64: 896, 256>}, {pipeline_mode = #tpu.pipeline_mode<synchronous>, transform_indices = @transform_2, window_bounds = array<i64: 1, 256>}, {pipeline_mode = #tpu.pipeline_mode<synchronous>, transform_indices = @transform_3, window_bounds = array<i64: 256, 128>}, {pipeline_mode = #tpu.pipeline_mode<synchronous>, transform_indices = @transform_4, window_bounds = array<i64: 1, 128>}, {pipeline_mode = #tpu.pipeline_mode<synchronous>, transform_indices = @transform_5, window_bounds = array<i64: 128, 128>}, {pipeline_mode = #tpu.pipeline_mode<synchronous>, transform_indices = @transform_6, window_bounds = array<i64: 1, 128>}, {pipeline_mode = #tpu.pipeline_mode<synchronous>, transform_indices = @transform_7, window_bounds = array<i64: 128, 128>}, {pipeline_mode = #tpu.pipeline_mode<synchronous>, transform_indices = @transform_8, window_bounds = array<i64: 1, 128>}, {transform_indices = @transform_9, window_bounds = array<i64: 16, 128>}]} {
    %c0 = arith.constant 0 : index
    %c0_0 = arith.constant 0 : index
    %0 = vector.load %arg1[%c0, %c0_0] : memref<16x896xbf16, #tpu.memory_space<vmem>>, vector<16x896xbf16>
    %c0_1 = arith.constant 0 : index
    %c0_2 = arith.constant 0 : index
    %1 = vector.load %arg2[%c0_1, %c0_2] : memref<896x256xbf16, #tpu.memory_space<vmem>>, vector<896x256xbf16>
    %cst = arith.constant dense<0.000000e+00> : vector<16x256xf32>
    %2 = tpu.matmul %0, %1, %cst {dimension_numbers = #tpu.dot_dimension_numbers<[1], [0], [0], [1], [0, 0, 1, 1], [], []>} : vector<16x896xbf16>, vector<896x256xbf16>, vector<16x256xf32> -> vector<16x256xf32>
    %c0_3 = arith.constant 0 : index
    %c0_4 = arith.constant 0 : index
    %3 = vector.load %arg3[%c0_3, %c0_4] : memref<1x256xf32, #tpu.memory_space<vmem>>, vector<1x256xf32>
    %4 = vector.broadcast %3 : vector<1x256xf32> to vector<16x256xf32>
    %5 = arith.addf %2, %4 : vector<16x256xf32>
    %cst_5 = arith.constant 0.000000e+00 : f32
    %6 = vector.broadcast %cst_5 : f32 to vector<16x256xf32>
    %7 = arith.maximumf %5, %6 : vector<16x256xf32>
    %8 = arith.truncf %7 : vector<16x256xf32> to vector<16x256xbf16>
    %c0_6 = arith.constant 0 : index
    %c0_7 = arith.constant 0 : index
    %9 = vector.load %arg4[%c0_6, %c0_7] : memref<256x128xbf16, #tpu.memory_space<vmem>>, vector<256x128xbf16>
    %cst_8 = arith.constant dense<0.000000e+00> : vector<16x128xf32>
    %10 = tpu.matmul %8, %9, %cst_8 {dimension_numbers = #tpu.dot_dimension_numbers<[1], [0], [0], [1], [0, 0, 1, 1], [], []>} : vector<16x256xbf16>, vector<256x128xbf16>, vector<16x128xf32> -> vector<16x128xf32>
    %c0_9 = arith.constant 0 : index
    %c0_10 = arith.constant 0 : index
    %11 = vector.load %arg5[%c0_9, %c0_10] : memref<1x128xf32, #tpu.memory_space<vmem>>, vector<1x128xf32>
    %12 = vector.broadcast %11 : vector<1x128xf32> to vector<16x128xf32>
    %13 = arith.addf %10, %12 : vector<16x128xf32>
    %cst_11 = arith.constant 0.000000e+00 : f32
    %14 = vector.broadcast %cst_11 : f32 to vector<16x128xf32>
    %15 = arith.maximumf %13, %14 : vector<16x128xf32>
    %16 = arith.truncf %15 : vector<16x128xf32> to vector<16x128xbf16>
    %c0_12 = arith.constant 0 : index
    %c0_13 = arith.constant 0 : index
    %17 = vector.load %arg6[%c0_12, %c0_13] : memref<128x128xbf16, #tpu.memory_space<vmem>>, vector<128x128xbf16>
    %cst_14 = arith.constant dense<0.000000e+00> : vector<16x128xf32>
    %18 = tpu.matmul %16, %17, %cst_14 {dimension_numbers = #tpu.dot_dimension_numbers<[1], [0], [0], [1], [0, 0, 1, 1], [], []>} : vector<16x128xbf16>, vector<128x128xbf16>, vector<16x128xf32> -> vector<16x128xf32>
    %c0_15 = arith.constant 0 : index
    %c0_16 = arith.constant 0 : index
    %19 = vector.load %arg7[%c0_15, %c0_16] : memref<1x128xf32, #tpu.memory_space<vmem>>, vector<1x128xf32>
    %20 = vector.broadcast %19 : vector<1x128xf32> to vector<16x128xf32>
    %21 = arith.addf %18, %20 : vector<16x128xf32>
    %cst_17 = arith.constant 0.000000e+00 : f32
    %22 = vector.broadcast %cst_17 : f32 to vector<16x128xf32>
    %23 = arith.maximumf %21, %22 : vector<16x128xf32>
    %24 = arith.truncf %23 : vector<16x128xf32> to vector<16x128xbf16>
    %c0_18 = arith.constant 0 : index
    %c0_19 = arith.constant 0 : index
    %25 = vector.load %arg8[%c0_18, %c0_19] : memref<128x128xbf16, #tpu.memory_space<vmem>>, vector<128x128xbf16>
    %cst_20 = arith.constant dense<0.000000e+00> : vector<16x128xf32>
    %26 = tpu.matmul %24, %25, %cst_20 {dimension_numbers = #tpu.dot_dimension_numbers<[1], [0], [0], [1], [0, 0, 1, 1], [], []>} : vector<16x128xbf16>, vector<128x128xbf16>, vector<16x128xf32> -> vector<16x128xf32>
    %c0_21 = arith.constant 0 : index
    %c0_22 = arith.constant 0 : index
    %27 = vector.load %arg9[%c0_21, %c0_22] : memref<1x128xf32, #tpu.memory_space<vmem>>, vector<1x128xf32>
    %28 = vector.broadcast %27 : vector<1x128xf32> to vector<16x128xf32>
    %29 = arith.addf %26, %28 : vector<16x128xf32>
    %30 = tpu.iota {dimensions = array<i32: 1>} : vector<16x128xi32>
    %c10_i32 = arith.constant 10 : i32
    %31 = vector.broadcast %c10_i32 : i32 to vector<16x128xi32>
    %32 = arith.cmpi slt, %30, %31 : vector<16x128xi32>
    %cst_23 = arith.constant 0xFF800000 : f32
    %33 = vector.broadcast %cst_23 : f32 to vector<16x128xf32>
    %34 = arith.select %32, %29, %33 : vector<16x128xi1>, vector<16x128xf32>
    %cst_24 = arith.constant dense<0xFF800000> : vector<16xf32>
    %35 = vector.multi_reduction <maximumf>, %34, %cst_24 [1] : vector<16x128xf32> to vector<16xf32>
    %36 = vector.shape_cast %35 : vector<16xf32> to vector<16x1xf32>
    %37 = vector.broadcast %36 : vector<16x1xf32> to vector<16x128xf32>
    %38 = arith.subf %34, %37 : vector<16x128xf32>
    %39 = math.exp %38 : vector<16x128xf32>
    %cst_25 = arith.constant dense<0.000000e+00> : vector<16xf32>
    %40 = vector.multi_reduction <add>, %39, %cst_25 [1] : vector<16x128xf32> to vector<16xf32>
    %41 = vector.shape_cast %40 : vector<16xf32> to vector<16x1xf32>
    %42 = math.log %41 : vector<16x1xf32>
    %43 = vector.broadcast %42 : vector<16x1xf32> to vector<16x128xf32>
    %44 = arith.subf %38, %43 : vector<16x128xf32>
    %c0_26 = arith.constant 0 : index
    %c0_27 = arith.constant 0 : index
    %45 = vector.load %arg10[%c0_26, %c0_27] : memref<16x128xf32, #tpu.memory_space<vmem>>, vector<16x128xf32>
    tpu.vector_store %arg10[%c0_26, %c0_27], %44 {strides = array<i32>} : memref<16x128xf32, #tpu.memory_space<vmem>>, vector<16x128xf32>,
    return
  }
  func.func @transform_0(%arg0: i32) -> (i32, i32) {
    %c0_i32 = arith.constant 0 : i32
    %c0_i32_0 = arith.constant 0 : i32
    return %arg0, %c0_i32 : i32, i32
  }
  func.func @transform_1(%arg0: i32) -> (i32, i32) {
    %c0_i32 = arith.constant 0 : i32
    %c0_i32_0 = arith.constant 0 : i32
    %c0_i32_1 = arith.constant 0 : i32
    return %c0_i32, %c0_i32_0 : i32, i32
  }
  func.func @transform_2(%arg0: i32) -> (i32, i32) {
    %c0_i32 = arith.constant 0 : i32
    %c0_i32_0 = arith.constant 0 : i32
    %c0_i32_1 = arith.constant 0 : i32
    return %c0_i32, %c0_i32_0 : i32, i32
  }
  func.func @transform_3(%arg0: i32) -> (i32, i32) {
    %c0_i32 = arith.constant 0 : i32
    %c0_i32_0 = arith.constant 0 : i32
    %c0_i32_1 = arith.constant 0 : i32
    return %c0_i32, %c0_i32_0 : i32, i32
  }
  func.func @transform_4(%arg0: i32) -> (i32, i32) {
    %c0_i32 = arith.constant 0 : i32
    %c0_i32_0 = arith.constant 0 : i32
    %c0_i32_1 = arith.constant 0 : i32
    return %c0_i32, %c0_i32_0 : i32, i32
  }
  func.func @transform_5(%arg0: i32) -> (i32, i32) {
    %c0_i32 = arith.constant 0 : i32
    %c0_i32_0 = arith.constant 0 : i32
    %c0_i32_1 = arith.constant 0 : i32
    return %c0_i32, %c0_i32_0 : i32, i32
  }
  func.func @transform_6(%arg0: i32) -> (i32, i32) {
    %c0_i32 = arith.constant 0 : i32
    %c0_i32_0 = arith.constant 0 : i32
    %c0_i32_1 = arith.constant 0 : i32
    return %c0_i32, %c0_i32_0 : i32, i32
  }
  func.func @transform_7(%arg0: i32) -> (i32, i32) {
    %c0_i32 = arith.constant 0 : i32
    %c0_i32_0 = arith.constant 0 : i32
    %c0_i32_1 = arith.constant 0 : i32
    return %c0_i32, %c0_i32_0 : i32, i32
  }
  func.func @transform_8(%arg0: i32) -> (i32, i32) {
    %c0_i32 = arith.constant 0 : i32
    %c0_i32_0 = arith.constant 0 : i32
    %c0_i32_1 = arith.constant 0 : i32
    return %c0_i32, %c0_i32_0 : i32, i32
  }
  func.func @transform_9(%arg0: i32) -> (i32, i32) {
    %c0_i32 = arith.constant 0 : i32
    %c0_i32_0 = arith.constant 0 : i32
    return %arg0, %c0_i32 : i32, i32
  }
}

</mosaic_0001>

<llo_original>
// kernel: tpu_custom_call.1
$region0: #{tpu_custom_call.1}
  #allocation0 [shape = 'u32[]', space=smem, size = 0x4, offset = 0x4, fixed_abs, tag = 'smem constant byte address 0x4 - core index']
  #allocation1 [shape = 'u32[72,128]{1,0:T(1,128)}', space=vmem, size = 0x9000, scoped, tag = 'internal scratch']
  %s0 = inlined_call_operand.hbm [shape: bf16[16,896], index: 0, kind: input, shape index: {}]
  %s1 = inlined_call_operand.hbm [shape: bf16[896,256], index: 1, kind: input, shape index: {}]
  %s2 = inlined_call_operand.hbm [shape: f32[1,256], index: 2, kind: input, shape index: {}]
  %s3 = inlined_call_operand.hbm [shape: bf16[256,128], index: 3, kind: input, shape index: {}]
  %s4 = inlined_call_operand.vmem [shape: f32[1,128], index: 4, kind: input, shape index: {}]
  %s5 = inlined_call_operand.hbm [shape: bf16[128,128], index: 5, kind: input, shape index: {}]
  %s6 = inlined_call_operand.vmem [shape: f32[1,128], index: 6, kind: input, shape index: {}]
  %s7 = inlined_call_operand.hbm [shape: bf16[128,128], index: 7, kind: input, shape index: {}]
  %s8 = inlined_call_operand.vmem [shape: f32[1,128], index: 8, kind: input, shape index: {}]
  %s9 = inlined_call_operand.hbm [shape: f32[16,128], index: 9, kind: output, shape index: {}]
  %s10 = sld [smem:[#allocation0]]
  $region70: #{tpu_custom_call.1} parent=0
    _
  %s12 = ssub.s32 1, %s10
  %s13 = scalar_select 0, %s12, %s10
  $region1: #{tpu_custom_call.1} parent=0
    #allocation2 [shape = 'u8[28672]{0}', space=vmem, size = 0x7000, scoped, tag = 'input window, operand 0, single buffered']
    #allocation3 [shape = 's32[1]{0}', space=sflag, size = 0x4, scoped, tag = 'scoped memory for tpu_custom_call.1']
    #allocation4 [shape = 's32[1]{0}', space=sflag, size = 0x4, scoped, tag = 'scoped memory for tpu_custom_call.1']
    #allocation5 [shape = 'u8[458752]{0}', space=vmem, size = 0x70000, scoped, tag = 'input window, operand 1, single buffered']
    #allocation6 [shape = 's32[1]{0}', space=sflag, size = 0x4, scoped, tag = 'scoped memory for tpu_custom_call.1']
    #allocation7 [shape = 'u8[1024]{0}', space=vmem, size = 0x400, scoped, tag = 'input window, operand 2, single buffered']
    #allocation8 [shape = 'u8[65536]{0}', space=vmem, size = 0x10000, scoped, tag = 'input window, operand 3, single buffered']
    #allocation9 [shape = 's32[1]{0}', space=sflag, size = 0x4, scoped, tag = 'scoped memory for tpu_custom_call.1']
    #allocation10 [shape = 'u8[32768]{0}', space=vmem, size = 0x8000, scoped, tag = 'input window, operand 5, single buffered']
    #allocation11 [shape = 'u8[32768]{0}', space=vmem, size = 0x8000, scoped, tag = 'input window, operand 7, single buffered']
    #allocation12 [shape = 's32[1]{0}', space=sflag, size = 0x4, scoped, tag = 'scoped memory for tpu_custom_call.1']
    #allocation13 [shape = 'u8[8192]{0}', space=vmem, size = 0x2000, scoped, tag = 'output window, operand 0, single buffered']
    %14 = vsyncpa [#allocation3], 0
    %15 = vsyncpa [#allocation6], 0
    %16 = vsyncpa [#allocation9], 0
    %17 = vsyncpa [#allocation12], 0
    %18 = vsyncpa [#allocation4], 0
    // Predicated region
    $region2: #{tpu_custom_call.1} parent=1 // pred_check
      _
    $region3: #{tpu_custom_call.1} parent=1 // pred_check_branch
      %20 = sbr.rel (0) target = $region5
    $region4: #{tpu_custom_call.1} parent=1 // pred_region
      %22 = vsyncadd [#allocation3], 0
      %s23 = sshll.u32 %s0, 4
      %s24 = int_to_ptr.hbm [resolvable:$true] %s23
      %s25 = sshll.u32 [#allocation2], 4
      %s26 = int_to_ptr.vmem [resolvable:$true] %s25
      %31 = dma.hbm_to_vmem [thread:$0]  %s24, 896, %s26, [#allocation3], 448, 448, 28
    $region5: #{tpu_custom_call.1} parent=1 // pred_fallthru
      _
    // Predicated region
    $region6: #{tpu_custom_call.1} parent=1 // pred_check
      _
    $region7: #{tpu_custom_call.1} parent=1 // pred_check_branch
      %33 = sbr.rel (0) target = $region9
    $region8: #{tpu_custom_call.1} parent=1 // pred_region
      %35 = vsyncadd [#allocation6], 0
      %s36 = sshll.u32 %s1, 4
      %s37 = int_to_ptr.hbm [resolvable:$true] %s36
      %s38 = sshll.u32 [#allocation5], 4
      %s39 = int_to_ptr.vmem [resolvable:$true] %s38
      %44 = dma.hbm_to_vmem [thread:$0]  %s37, 14336, %s39, [#allocation6], 128, 128, 8
    $region9: #{tpu_custom_call.1} parent=1 // pred_fallthru
      _
    // Predicated region
    $region10: #{tpu_custom_call.1} parent=1 // pred_check
      _
    $region11: #{tpu_custom_call.1} parent=1 // pred_check_branch
      %46 = sbr.rel (0) target = $region13
    $region12: #{tpu_custom_call.1} parent=1 // pred_region
      %48 = vsyncadd [#allocation6], 0
      %s50 = sshll.u32 %s2, 4
      %s51 = int_to_ptr.hbm [resolvable:$true] %s50
      %s52 = sshll.u32 [#allocation7], 4
      %s53 = int_to_ptr.vmem [resolvable:$true] %s52
      %55 = dma.hbm_to_vmem [thread:$0]  %s51, 32, %s53, [#allocation6]
    $region13: #{tpu_custom_call.1} parent=1 // pred_fallthru
      _
    // Predicated region
    $region14: #{tpu_custom_call.1} parent=1 // pred_check
      _
    $region15: #{tpu_custom_call.1} parent=1 // pred_check_branch
      %57 = sbr.rel (0) target = $region17
    $region16: #{tpu_custom_call.1} parent=1 // pred_region
      %59 = vsyncadd [#allocation9], 0
      %s60 = sshll.u32 %s3, 4
      %s61 = int_to_ptr.hbm [resolvable:$true] %s60
      %s62 = sshll.u32 [#allocation8], 4
      %s63 = int_to_ptr.vmem [resolvable:$true] %s62
      %68 = dma.hbm_to_vmem [thread:$0]  %s61, 2048, %s63, [#allocation9], 64, 64, 4
    $region17: #{tpu_custom_call.1} parent=1 // pred_fallthru
      _
    // Predicated region
    $region18: #{tpu_custom_call.1} parent=1 // pred_check
      _
    $region19: #{tpu_custom_call.1} parent=1 // pred_check_branch
      %70 = sbr.rel (0) target = $region21
    $region20: #{tpu_custom_call.1} parent=1 // pred_region
      _
    $region21: #{tpu_custom_call.1} parent=1 // pred_fallthru
      _
    // Predicated region
    $region22: #{tpu_custom_call.1} parent=1 // pred_check
      _
    $region23: #{tpu_custom_call.1} parent=1 // pred_check_branch
      %72 = sbr.rel (0) target = $region25
    $region24: #{tpu_custom_call.1} parent=1 // pred_region
      %74 = vsyncadd [#allocation9], 0
      %s75 = sshll.u32 %s5, 4
      %s76 = int_to_ptr.hbm [resolvable:$true] %s75
      %s77 = sshll.u32 [#allocation10], 4
      %s78 = int_to_ptr.vmem [resolvable:$true] %s77
      %83 = dma.hbm_to_vmem [thread:$0]  %s76, 1024, %s78, [#allocation9], 64, 64, 4
    $region25: #{tpu_custom_call.1} parent=1 // pred_fallthru
      _
    // Predicated region
    $region26: #{tpu_custom_call.1} parent=1 // pred_check
      _
    $region27: #{tpu_custom_call.1} parent=1 // pred_check_branch
      %85 = sbr.rel (0) target = $region29
    $region28: #{tpu_custom_call.1} parent=1 // pred_region
      _
    $region29: #{tpu_custom_call.1} parent=1 // pred_fallthru
      _
    // Predicated region
    $region30: #{tpu_custom_call.1} parent=1 // pred_check
      _
    $region31: #{tpu_custom_call.1} parent=1 // pred_check_branch
      %87 = sbr.rel (0) target = $region33
    $region32: #{tpu_custom_call.1} parent=1 // pred_region
      %89 = vsyncadd [#allocation12], 0
      %s90 = sshll.u32 %s7, 4
      %s91 = int_to_ptr.hbm [resolvable:$true] %s90
      %s92 = sshll.u32 [#allocation11], 4
      %s93 = int_to_ptr.vmem [resolvable:$true] %s92
      %98 = dma.hbm_to_vmem [thread:$0]  %s91, 1024, %s93, [#allocation12], 64, 64, 4
    $region33: #{tpu_custom_call.1} parent=1 // pred_fallthru
      _
    // Predicated region
    $region34: #{tpu_custom_call.1} parent=1 // pred_check
      _
    $region35: #{tpu_custom_call.1} parent=1 // pred_check_branch
      %100 = sbr.rel (0) target = $region37
    $region36: #{tpu_custom_call.1} parent=1 // pred_region
      _
    $region37: #{tpu_custom_call.1} parent=1 // pred_fallthru
      _
    // Predicated region
    $region38: #{tpu_custom_call.1} parent=1 // pred_check
      _
    $region39: #{tpu_custom_call.1} parent=1 // pred_check_branch
      %102 = sbr.rel (0) target = $region41
    $region40: #{tpu_custom_call.1} parent=1 // pred_region
      %104 = dma.done [#allocation3], 896
    $region41: #{tpu_custom_call.1} parent=1 // pred_fallthru
      _
    // Predicated region
    $region42: #{tpu_custom_call.1} parent=1 // pred_check
      _
    $region43: #{tpu_custom_call.1} parent=1 // pred_check_branch
      %106 = sbr.rel (0) target = $region45
    $region44: #{tpu_custom_call.1} parent=1 // pred_region
      %108 = dma.done [#allocation6], 14336
    $region45: #{tpu_custom_call.1} parent=1 // pred_fallthru
      _
    // Predicated region
    $region46: #{tpu_custom_call.1} parent=1 // pred_check
      _
    $region47: #{tpu_custom_call.1} parent=1 // pred_check_branch
      %110 = sbr.rel (0) target = $region49
    $region48: #{tpu_custom_call.1} parent=1 // pred_region
      %112 = dma.done [#allocation6], 32
    $region49: #{tpu_custom_call.1} parent=1 // pred_fallthru
      _
    // Predicated region
    $region50: #{tpu_custom_call.1} parent=1 // pred_check
      _
    $region51: #{tpu_custom_call.1} parent=1 // pred_check_branch
      %114 = sbr.rel (0) target = $region53
    $region52: #{tpu_custom_call.1} parent=1 // pred_region
      %116 = dma.done [#allocation9], 2048
    $region53: #{tpu_custom_call.1} parent=1 // pred_fallthru
      _
    // Predicated region
    $region54: #{tpu_custom_call.1} parent=1 // pred_check
      _
    $region55: #{tpu_custom_call.1} parent=1 // pred_check_branch
      %118 = sbr.rel (0) target = $region57
    $region56: #{tpu_custom_call.1} parent=1 // pred_region
      %120 = dma.done [#allocation9], 1024
    $region57: #{tpu_custom_call.1} parent=1 // pred_fallthru
      _
    // Predicated region
    $region58: #{tpu_custom_call.1} parent=1 // pred_check
      _
    $region59: #{tpu_custom_call.1} parent=1 // pred_check_branch
      %122 = sbr.rel (0) target = $region61
    $region60: #{tpu_custom_call.1} parent=1 // pred_region
      %124 = dma.done [#allocation12], 1024
    $region61: #{tpu_custom_call.1} parent=1 // pred_fallthru
      _
    %v125 = vld [vmem:[#allocation2] sm:$0xff]
    %v126 = vld [vmem:[#allocation2 + $0x8] sm:$0xff]
    %v127 = vld [vmem:[#allocation2 + $0x10] sm:$0xff]
    %v128 = vld [vmem:[#allocation2 + $0x18] sm:$0xf]
    %v129 = vld [vmem:[#allocation2 + $0x1c] sm:$0xff]
    %v130 = vld [vmem:[#allocation2 + $0x24] sm:$0xff]
    %v131 = vld [vmem:[#allocation2 + $0x2c] sm:$0xff]
    %v132 = vld [vmem:[#allocation2 + $0x34] sm:$0xf]
    %v133 = vld [vmem:[#allocation5] sm:$0xff]
    %v134 = vld [vmem:[#allocation5 + $0x8] sm:$0xff]
    %v135 = vld [vmem:[#allocation5 + $0x10] sm:$0xff]
    %v136 = vld [vmem:[#allocation5 + $0x18] sm:$0xff]
    %v137 = vld [vmem:[#allocation5 + $0x20] sm:$0xff]
    %v138 = vld [vmem:[#allocation5 + $0x28] sm:$0xff]
    %v139 = vld [vmem:[#allocation5 + $0x30] sm:$0xff]
    %v140 = vld [vmem:[#allocation5 + $0x38] sm:$0xff]
    %v141 = vld [vmem:[#allocation5 + $0x40] sm:$0xff]
    %v142 = vld [vmem:[#allocation5 + $0x48] sm:$0xff]
    %v143 = vld [vmem:[#allocation5 + $0x50] sm:$0xff]
    %v144 = vld [vmem:[#allocation5 + $0x58] sm:$0xff]
    %v145 = vld [vmem:[#allocation5 + $0x60] sm:$0xff]
    %v146 = vld [vmem:[#allocation5 + $0x68] sm:$0xff]
    %v147 = vld [vmem:[#allocation5 + $0x70] sm:$0xff]
    %v148 = vld [vmem:[#allocation5 + $0x78] sm:$0xff]
    %v149 = vld [vmem:[#allocation5 + $0x80] sm:$0xff]
    %v150 = vld [vmem:[#allocation5 + $0x88] sm:$0xff]
    %v151 = vld [vmem:[#allocation5 + $0x90] sm:$0xff]
    %v152 = vld [vmem:[#allocation5 + $0x98] sm:$0xff]
    %v153 = vld [vmem:[#allocation5 + $0xa0] sm:$0xff]
    %v154 = vld [vmem:[#allocation5 + $0xa8] sm:$0xff]
    %v155 = vld [vmem:[#allocation5 + $0xb0] sm:$0xff]
    %v156 = vld [vmem:[#allocation5 + $0xb8] sm:$0xff]
    %v157 = vld [vmem:[#allocation5 + $0xc0] sm:$0xff]
    %v158 = vld [vmem:[#allocation5 + $0xc8] sm:$0xff]
    %v159 = vld [vmem:[#allocation5 + $0xd0] sm:$0xff]
    %v160 = vld [vmem:[#allocation5 + $0xd8] sm:$0xff]
    %v161 = vld [vmem:[#allocation5 + $0xe0] sm:$0xff]
    %v162 = vld [vmem:[#allocation5 + $0xe8] sm:$0xff]
    %v163 = vld [vmem:[#allocation5 + $0xf0] sm:$0xff]
    %v164 = vld [vmem:[#allocation5 + $0xf8] sm:$0xff]
    %v165 = vld [vmem:[#allocation5 + $0x100] sm:$0xff]
    %v166 = vld [vmem:[#allocation5 + $0x108] sm:$0xff]
    %v167 = vld [vmem:[#allocation5 + $0x110] sm:$0xff]
    %v168 = vld [vmem:[#allocation5 + $0x118] sm:$0xff]
    %v169 = vld [vmem:[#allocation5 + $0x120] sm:$0xff]
    %v170 = vld [vmem:[#allocation5 + $0x128] sm:$0xff]
    %v171 = vld [vmem:[#allocation5 + $0x130] sm:$0xff]
    %v172 = vld [vmem:[#allocation5 + $0x138] sm:$0xff]
    %v173 = vld [vmem:[#allocation5 + $0x140] sm:$0xff]
    %v174 = vld [vmem:[#allocation5 + $0x148] sm:$0xff]
    %v175 = vld [vmem:[#allocation5 + $0x150] sm:$0xff]
    %v176 = vld [vmem:[#allocation5 + $0x158] sm:$0xff]
    %v177 = vld [vmem:[#allocation5 + $0x160] sm:$0xff]
    %v178 = vld [vmem:[#allocation5 + $0x168] sm:$0xff]
    %v179 = vld [vmem:[#allocation5 + $0x170] sm:$0xff]
    %v180 = vld [vmem:[#allocation5 + $0x178] sm:$0xff]
    %v181 = vld [vmem:[#allocation5 + $0x180] sm:$0xff]
    %v182 = vld [vmem:[#allocation5 + $0x188] sm:$0xff]
    %v183 = vld [vmem:[#allocation5 + $0x190] sm:$0xff]
    %v184 = vld [vmem:[#allocation5 + $0x198] sm:$0xff]
    %v185 = vld [vmem:[#allocation5 + $0x1a0] sm:$0xff]
    %v186 = vld [vmem:[#allocation5 + $0x1a8] sm:$0xff]
    %v187 = vld [vmem:[#allocation5 + $0x1b0] sm:$0xff]
    %v188 = vld [vmem:[#allocation5 + $0x1b8] sm:$0xff]
    %v189 = vld [vmem:[#allocation5 + $0x1c0] sm:$0xff]
    %v190 = vld [vmem:[#allocation5 + $0x1c8] sm:$0xff]
    %v191 = vld [vmem:[#allocation5 + $0x1d0] sm:$0xff]
    %v192 = vld [vmem:[#allocation5 + $0x1d8] sm:$0xff]
    %v193 = vld [vmem:[#allocation5 + $0x1e0] sm:$0xff]
    %v194 = vld [vmem:[#allocation5 + $0x1e8] sm:$0xff]
    %v195 = vld [vmem:[#allocation5 + $0x1f0] sm:$0xff]
    %v196 = vld [vmem:[#allocation5 + $0x1f8] sm:$0xff]
    %v197 = vld [vmem:[#allocation5 + $0x200] sm:$0xff]
    %v198 = vld [vmem:[#allocation5 + $0x208] sm:$0xff]
    %v199 = vld [vmem:[#allocation5 + $0x210] sm:$0xff]
    %v200 = vld [vmem:[#allocation5 + $0x218] sm:$0xff]
    %v201 = vld [vmem:[#allocation5 + $0x220] sm:$0xff]
    %v202 = vld [vmem:[#allocation5 + $0x228] sm:$0xff]
    %v203 = vld [vmem:[#allocation5 + $0x230] sm:$0xff]
    %v204 = vld [vmem:[#allocation5 + $0x238] sm:$0xff]
    %v205 = vld [vmem:[#allocation5 + $0x240] sm:$0xff]
    %v206 = vld [vmem:[#allocation5 + $0x248] sm:$0xff]
    %v207 = vld [vmem:[#allocation5 + $0x250] sm:$0xff]
    %v208 = vld [vmem:[#allocation5 + $0x258] sm:$0xff]
    %v209 = vld [vmem:[#allocation5 + $0x260] sm:$0xff]
    %v210 = vld [vmem:[#allocation5 + $0x268] sm:$0xff]
    %v211 = vld [vmem:[#allocation5 + $0x270] sm:$0xff]
    %v212 = vld [vmem:[#allocation5 + $0x278] sm:$0xff]
    %v213 = vld [vmem:[#allocation5 + $0x280] sm:$0xff]
    %v214 = vld [vmem:[#allocation5 + $0x288] sm:$0xff]
    %v215 = vld [vmem:[#allocation5 + $0x290] sm:$0xff]
    %v216 = vld [vmem:[#allocation5 + $0x298] sm:$0xff]
    %v217 = vld [vmem:[#allocation5 + $0x2a0] sm:$0xff]
    %v218 = vld [vmem:[#allocation5 + $0x2a8] sm:$0xff]
    %v219 = vld [vmem:[#allocation5 + $0x2b0] sm:$0xff]
    %v220 = vld [vmem:[#allocation5 + $0x2b8] sm:$0xff]
    %v221 = vld [vmem:[#allocation5 + $0x2c0] sm:$0xff]
    %v222 = vld [vmem:[#allocation5 + $0x2c8] sm:$0xff]
    %v223 = vld [vmem:[#allocation5 + $0x2d0] sm:$0xff]
    %v224 = vld [vmem:[#allocation5 + $0x2d8] sm:$0xff]
    %v225 = vld [vmem:[#allocation5 + $0x2e0] sm:$0xff]
    %v226 = vld [vmem:[#allocation5 + $0x2e8] sm:$0xff]
    %v227 = vld [vmem:[#allocation5 + $0x2f0] sm:$0xff]
    %v228 = vld [vmem:[#allocation5 + $0x2f8] sm:$0xff]
    %v229 = vld [vmem:[#allocation5 + $0x300] sm:$0xff]
    %v230 = vld [vmem:[#allocation5 + $0x308] sm:$0xff]
    %v231 = vld [vmem:[#allocation5 + $0x310] sm:$0xff]
    %v232 = vld [vmem:[#allocation5 + $0x318] sm:$0xff]
    %v233 = vld [vmem:[#allocation5 + $0x320] sm:$0xff]
    %v234 = vld [vmem:[#allocation5 + $0x328] sm:$0xff]
    %v235 = vld [vmem:[#allocation5 + $0x330] sm:$0xff]
    %v236 = vld [vmem:[#allocation5 + $0x338] sm:$0xff]
    %v237 = vld [vmem:[#allocation5 + $0x340] sm:$0xff]
    %v238 = vld [vmem:[#allocation5 + $0x348] sm:$0xff]
    %v239 = vld [vmem:[#allocation5 + $0x350] sm:$0xff]
    %v240 = vld [vmem:[#allocation5 + $0x358] sm:$0xff]
    %v241 = vld [vmem:[#allocation5 + $0x360] sm:$0xff]
    %v242 = vld [vmem:[#allocation5 + $0x368] sm:$0xff]
    %v243 = vld [vmem:[#allocation5 + $0x370] sm:$0xff]
    %v244 = vld [vmem:[#allocation5 + $0x378] sm:$0xff]
    %v245 = vld [vmem:[#allocation7] sm:$0x3]
    %v247 = vperm.slane %v245, 0
    %v248 = vperm.slane %v245, 1
    %v259 = vunpack.c.l.b16 %v125
    %v260 = vunpack.c.h.b16 %v125
    %v261 = vunpack.c.l.b16 %v126
    %v262 = vunpack.c.h.b16 %v126
    %v263 = vunpack.c.l.b16 %v127
    %v264 = vunpack.c.h.b16 %v127
    %v265 = vunpack.c.l.b16 %v128
    %v266 = vunpack.c.l.b16 %v129
    %v267 = vunpack.c.h.b16 %v129
    %v268 = vunpack.c.l.b16 %v130
    %v269 = vunpack.c.h.b16 %v130
    %v270 = vunpack.c.l.b16 %v131
    %v271 = vunpack.c.h.b16 %v131
    %v272 = vunpack.c.l.b16 %v132
    %v273 = vpack.c.b16 %v266, %v259
    %v274 = vpack.c.b16 %v267, %v260
    %v275 = vpack.c.b16 %v268, %v261
    %v276 = vpack.c.b16 %v269, %v262
    %v277 = vpack.c.b16 %v270, %v263
    %v278 = vpack.c.b16 %v271, %v264
    %v279 = vpack.c.b16 %v272, %v265
    %v399 = vunpack.c.l.b16 %v133
    %v400 = vunpack.c.h.b16 %v133
    %v401 = vunpack.c.l.b16 %v134
    %v402 = vunpack.c.h.b16 %v134
    %v403 = vunpack.c.l.b16 %v135
    %v404 = vunpack.c.h.b16 %v135
    %v405 = vunpack.c.l.b16 %v136
    %v406 = vunpack.c.h.b16 %v136
    %v407 = vunpack.c.l.b16 %v137
    %v408 = vunpack.c.h.b16 %v137
    %v409 = vunpack.c.l.b16 %v138
    %v410 = vunpack.c.h.b16 %v138
    %v411 = vunpack.c.l.b16 %v139
    %v412 = vunpack.c.h.b16 %v139
    %v413 = vunpack.c.l.b16 %v140
    %v414 = vunpack.c.h.b16 %v140
    %v415 = vunpack.c.l.b16 %v141
    %v416 = vunpack.c.h.b16 %v141
    %v417 = vunpack.c.l.b16 %v142
    %v418 = vunpack.c.h.b16 %v142
    %v419 = vunpack.c.l.b16 %v143
    %v420 = vunpack.c.h.b16 %v143
    %v421 = vunpack.c.l.b16 %v144
    %v422 = vunpack.c.h.b16 %v144
    %v423 = vunpack.c.l.b16 %v145
    %v424 = vunpack.c.h.b16 %v145
    %v425 = vunpack.c.l.b16 %v146
    %v426 = vunpack.c.h.b16 %v146
    %v427 = vunpack.c.l.b16 %v147
    %v428 = vunpack.c.h.b16 %v147
    %v429 = vunpack.c.l.b16 %v148
    %v430 = vunpack.c.h.b16 %v148
    %v431 = vunpack.c.l.b16 %v149
    %v432 = vunpack.c.h.b16 %v149
    %v433 = vunpack.c.l.b16 %v150
    %v434 = vunpack.c.h.b16 %v150
    %v435 = vunpack.c.l.b16 %v151
    %v436 = vunpack.c.h.b16 %v151
    %v437 = vunpack.c.l.b16 %v152
    %v438 = vunpack.c.h.b16 %v152
    %v439 = vunpack.c.l.b16 %v153
    %v440 = vunpack.c.h.b16 %v153
    %v441 = vunpack.c.l.b16 %v154
    %v442 = vunpack.c.h.b16 %v154
    %v443 = vunpack.c.l.b16 %v155
    %v444 = vunpack.c.h.b16 %v155
    %v445 = vunpack.c.l.b16 %v156
    %v446 = vunpack.c.h.b16 %v156
    %v447 = vunpack.c.l.b16 %v157
    %v448 = vunpack.c.h.b16 %v157
    %v449 = vunpack.c.l.b16 %v158
    %v450 = vunpack.c.h.b16 %v158
    %v451 = vunpack.c.l.b16 %v159
    %v452 = vunpack.c.h.b16 %v159
    %v453 = vunpack.c.l.b16 %v160
    %v454 = vunpack.c.h.b16 %v160
    %v455 = vunpack.c.l.b16 %v161
    %v456 = vunpack.c.h.b16 %v161
    %v457 = vunpack.c.l.b16 %v162
    %v458 = vunpack.c.h.b16 %v162
    %v459 = vunpack.c.l.b16 %v163
    %v460 = vunpack.c.h.b16 %v163
    %v461 = vunpack.c.l.b16 %v164
    %v462 = vunpack.c.h.b16 %v164
    %v463 = vunpack.c.l.b16 %v165
    %v464 = vunpack.c.h.b16 %v165
    %v465 = vunpack.c.l.b16 %v166
    %v466 = vunpack.c.h.b16 %v166
    %v467 = vunpack.c.l.b16 %v167
    %v468 = vunpack.c.h.b16 %v167
    %v469 = vunpack.c.l.b16 %v168
    %v470 = vunpack.c.h.b16 %v168
    %v471 = vunpack.c.l.b16 %v169
    %v472 = vunpack.c.h.b16 %v169
    %v473 = vunpack.c.l.b16 %v170
    %v474 = vunpack.c.h.b16 %v170
    %v475 = vunpack.c.l.b16 %v171
    %v476 = vunpack.c.h.b16 %v171
    %v477 = vunpack.c.l.b16 %v172
    %v478 = vunpack.c.h.b16 %v172
    %v479 = vunpack.c.l.b16 %v173
    %v480 = vunpack.c.h.b16 %v173
    %v481 = vunpack.c.l.b16 %v174
    %v482 = vunpack.c.h.b16 %v174
    %v483 = vunpack.c.l.b16 %v175
    %v484 = vunpack.c.h.b16 %v175
    %v485 = vunpack.c.l.b16 %v176
    %v486 = vunpack.c.h.b16 %v176
    %v487 = vunpack.c.l.b16 %v177
    %v488 = vunpack.c.h.b16 %v177
    %v489 = vunpack.c.l.b16 %v178
    %v490 = vunpack.c.h.b16 %v178
    %v491 = vunpack.c.l.b16 %v179
    %v492 = vunpack.c.h.b16 %v179
    %v493 = vunpack.c.l.b16 %v180
    %v494 = vunpack.c.h.b16 %v180
    %v495 = vunpack.c.l.b16 %v181
    %v496 = vunpack.c.h.b16 %v181
    %v497 = vunpack.c.l.b16 %v182
    %v498 = vunpack.c.h.b16 %v182
    %v499 = vunpack.c.l.b16 %v183
    %v500 = vunpack.c.h.b16 %v183
    %v501 = vunpack.c.l.b16 %v184
    %v502 = vunpack.c.h.b16 %v184
    %v503 = vunpack.c.l.b16 %v185
    %v504 = vunpack.c.h.b16 %v185
    %v505 = vunpack.c.l.b16 %v186
    %v506 = vunpack.c.h.b16 %v186
    %v507 = vunpack.c.l.b16 %v187
    %v508 = vunpack.c.h.b16 %v187
    %v509 = vunpack.c.l.b16 %v188
    %v510 = vunpack.c.h.b16 %v188
    %v511 = vunpack.c.l.b16 %v189
    %v512 = vunpack.c.h.b16 %v189
    %v513 = vunpack.c.l.b16 %v190
    %v514 = vunpack.c.h.b16 %v190
    %v515 = vunpack.c.l.b16 %v191
    %v516 = vunpack.c.h.b16 %v191
    %v517 = vunpack.c.l.b16 %v192
    %v518 = vunpack.c.h.b16 %v192
    %v519 = vunpack.c.l.b16 %v193
    %v520 = vunpack.c.h.b16 %v193
    %v521 = vunpack.c.l.b16 %v194
    %v522 = vunpack.c.h.b16 %v194
    %v523 = vunpack.c.l.b16 %v195
    %v524 = vunpack.c.h.b16 %v195
    %v525 = vunpack.c.l.b16 %v196
    %v526 = vunpack.c.h.b16 %v196
    %v527 = vunpack.c.l.b16 %v197
    %v528 = vunpack.c.h.b16 %v197
    %v529 = vunpack.c.l.b16 %v198
    %v530 = vunpack.c.h.b16 %v198
    %v531 = vunpack.c.l.b16 %v199
    %v532 = vunpack.c.h.b16 %v199
    %v533 = vunpack.c.l.b16 %v200
    %v534 = vunpack.c.h.b16 %v200
    %v535 = vunpack.c.l.b16 %v201
    %v536 = vunpack.c.h.b16 %v201
    %v537 = vunpack.c.l.b16 %v202
    %v538 = vunpack.c.h.b16 %v202
    %v539 = vunpack.c.l.b16 %v203
    %v540 = vunpack.c.h.b16 %v203
    %v541 = vunpack.c.l.b16 %v204
    %v542 = vunpack.c.h.b16 %v204
    %v543 = vunpack.c.l.b16 %v205
    %v544 = vunpack.c.h.b16 %v205
    %v545 = vunpack.c.l.b16 %v206
    %v546 = vunpack.c.h.b16 %v206
    %v547 = vunpack.c.l.b16 %v207
    %v548 = vunpack.c.h.b16 %v207
    %v549 = vunpack.c.l.b16 %v208
    %v550 = vunpack.c.h.b16 %v208
    %v551 = vunpack.c.l.b16 %v209
    %v552 = vunpack.c.h.b16 %v209
    %v553 = vunpack.c.l.b16 %v210
    %v554 = vunpack.c.h.b16 %v210
    %v555 = vunpack.c.l.b16 %v211
    %v556 = vunpack.c.h.b16 %v211
    %v557 = vunpack.c.l.b16 %v212
    %v558 = vunpack.c.h.b16 %v212
    %v559 = vunpack.c.l.b16 %v213
    %v560 = vunpack.c.h.b16 %v213
    %v561 = vunpack.c.l.b16 %v214
    %v562 = vunpack.c.h.b16 %v214
    %v563 = vunpack.c.l.b16 %v215
    %v564 = vunpack.c.h.b16 %v215
    %v565 = vunpack.c.l.b16 %v216
    %v566 = vunpack.c.h.b16 %v216
    %v567 = vunpack.c.l.b16 %v217
    %v568 = vunpack.c.h.b16 %v217
    %v569 = vunpack.c.l.b16 %v218
    %v570 = vunpack.c.h.b16 %v218
    %v571 = vunpack.c.l.b16 %v219
    %v572 = vunpack.c.h.b16 %v219
    %v573 = vunpack.c.l.b16 %v220
    %v574 = vunpack.c.h.b16 %v220
    %v575 = vunpack.c.l.b16 %v221
    %v576 = vunpack.c.h.b16 %v221
    %v577 = vunpack.c.l.b16 %v222
    %v578 = vunpack.c.h.b16 %v222
    %v579 = vunpack.c.l.b16 %v223
    %v580 = vunpack.c.h.b16 %v223
    %v581 = vunpack.c.l.b16 %v224
    %v582 = vunpack.c.h.b16 %v224
    %v583 = vunpack.c.l.b16 %v225
    %v584 = vunpack.c.h.b16 %v225
    %v585 = vunpack.c.l.b16 %v226
    %v586 = vunpack.c.h.b16 %v226
    %v587 = vunpack.c.l.b16 %v227
    %v588 = vunpack.c.h.b16 %v227
    %v589 = vunpack.c.l.b16 %v228
    %v590 = vunpack.c.h.b16 %v228
    %v591 = vunpack.c.l.b16 %v229
    %v592 = vunpack.c.h.b16 %v229
    %v593 = vunpack.c.l.b16 %v230
    %v594 = vunpack.c.h.b16 %v230
    %v595 = vunpack.c.l.b16 %v231
    %v596 = vunpack.c.h.b16 %v231
    %v597 = vunpack.c.l.b16 %v232
    %v598 = vunpack.c.h.b16 %v232
    %v599 = vunpack.c.l.b16 %v233
    %v600 = vunpack.c.h.b16 %v233
    %v601 = vunpack.c.l.b16 %v234
    %v602 = vunpack.c.h.b16 %v234
    %v603 = vunpack.c.l.b16 %v235
    %v604 = vunpack.c.h.b16 %v235
    %v605 = vunpack.c.l.b16 %v236
    %v606 = vunpack.c.h.b16 %v236
    %v607 = vunpack.c.l.b16 %v237
    %v608 = vunpack.c.h.b16 %v237
    %v609 = vunpack.c.l.b16 %v238
    %v610 = vunpack.c.h.b16 %v238
    %v611 = vunpack.c.l.b16 %v239
    %v612 = vunpack.c.h.b16 %v239
    %v613 = vunpack.c.l.b16 %v240
    %v614 = vunpack.c.h.b16 %v240
    %v615 = vunpack.c.l.b16 %v241
    %v616 = vunpack.c.h.b16 %v241
    %v617 = vunpack.c.l.b16 %v242
    %v618 = vunpack.c.h.b16 %v242
    %v619 = vunpack.c.l.b16 %v243
    %v620 = vunpack.c.h.b16 %v243
    %v621 = vunpack.c.l.b16 %v244
    %v622 = vunpack.c.h.b16 %v244
    %v623 = vpack.c.b16 %v401, %v399
    %v624 = vpack.c.b16 %v402, %v400
    %v625 = vpack.c.b16 %v405, %v403
    %v626 = vpack.c.b16 %v406, %v404
    %v627 = vpack.c.b16 %v409, %v407
    %v628 = vpack.c.b16 %v410, %v408
    %v629 = vpack.c.b16 %v413, %v411
    %v630 = vpack.c.b16 %v414, %v412
    %v631 = vpack.c.b16 %v417, %v415
    %v632 = vpack.c.b16 %v418, %v416
    %v633 = vpack.c.b16 %v421, %v419
    %v634 = vpack.c.b16 %v422, %v420
    %v635 = vpack.c.b16 %v425, %v423
    %v636 = vpack.c.b16 %v426, %v424
    %v637 = vpack.c.b16 %v429, %v427
    %v638 = vpack.c.b16 %v430, %v428
    %v639 = vpack.c.b16 %v433, %v431
    %v640 = vpack.c.b16 %v434, %v432
    %v641 = vpack.c.b16 %v437, %v435
    %v642 = vpack.c.b16 %v438, %v436
    %v643 = vpack.c.b16 %v441, %v439
    %v644 = vpack.c.b16 %v442, %v440
    %v645 = vpack.c.b16 %v445, %v443
    %v646 = vpack.c.b16 %v446, %v444
    %v647 = vpack.c.b16 %v449, %v447
    %v648 = vpack.c.b16 %v450, %v448
    %v649 = vpack.c.b16 %v453, %v451
    %v650 = vpack.c.b16 %v454, %v452
    %v651 = vpack.c.b16 %v457, %v455
    %v652 = vpack.c.b16 %v458, %v456
    %v653 = vpack.c.b16 %v461, %v459
    %v654 = vpack.c.b16 %v462, %v460
    %v655 = vpack.c.b16 %v465, %v463
    %v656 = vpack.c.b16 %v466, %v464
    %v657 = vpack.c.b16 %v469, %v467
    %v658 = vpack.c.b16 %v470, %v468
    %v659 = vpack.c.b16 %v473, %v471
    %v660 = vpack.c.b16 %v474, %v472
    %v661 = vpack.c.b16 %v477, %v475
    %v662 = vpack.c.b16 %v478, %v476
    %v663 = vpack.c.b16 %v481, %v479
    %v664 = vpack.c.b16 %v482, %v480
    %v665 = vpack.c.b16 %v485, %v483
    %v666 = vpack.c.b16 %v486, %v484
    %v667 = vpack.c.b16 %v489, %v487
    %v668 = vpack.c.b16 %v490, %v488
    %v669 = vpack.c.b16 %v493, %v491
    %v670 = vpack.c.b16 %v494, %v492
    %v671 = vpack.c.b16 %v497, %v495
    %v672 = vpack.c.b16 %v498, %v496
    %v673 = vpack.c.b16 %v501, %v499
    %v674 = vpack.c.b16 %v502, %v500
    %v675 = vpack.c.b16 %v505, %v503
    %v676 = vpack.c.b16 %v506, %v504
    %v677 = vpack.c.b16 %v509, %v507
    %v678 = vpack.c.b16 %v510, %v508
    %v679 = vpack.c.b16 %v513, %v511
    %v680 = vpack.c.b16 %v514, %v512
    %v681 = vpack.c.b16 %v517, %v515
    %v682 = vpack.c.b16 %v518, %v516
    %v683 = vpack.c.b16 %v521, %v519
    %v684 = vpack.c.b16 %v522, %v520
    %v685 = vpack.c.b16 %v525, %v523
    %v686 = vpack.c.b16 %v526, %v524
    %v687 = vpack.c.b16 %v529, %v527
    %v688 = vpack.c.b16 %v530, %v528
    %v689 = vpack.c.b16 %v533, %v531
    %v690 = vpack.c.b16 %v534, %v532
    %v691 = vpack.c.b16 %v537, %v535
    %v692 = vpack.c.b16 %v538, %v536
    %v693 = vpack.c.b16 %v541, %v539
    %v694 = vpack.c.b16 %v542, %v540
    %v695 = vpack.c.b16 %v545, %v543
    %v696 = vpack.c.b16 %v546, %v544
    %v697 = vpack.c.b16 %v549, %v547
    %v698 = vpack.c.b16 %v550, %v548
    %v699 = vpack.c.b16 %v553, %v551
    %v700 = vpack.c.b16 %v554, %v552
    %v701 = vpack.c.b16 %v557, %v555
    %v702 = vpack.c.b16 %v558, %v556
    %v703 = vpack.c.b16 %v561, %v559
    %v704 = vpack.c.b16 %v562, %v560
    %v705 = vpack.c.b16 %v565, %v563
    %v706 = vpack.c.b16 %v566, %v564
    %v707 = vpack.c.b16 %v569, %v567
    %v708 = vpack.c.b16 %v570, %v568
    %v709 = vpack.c.b16 %v573, %v571
    %v710 = vpack.c.b16 %v574, %v572
    %v711 = vpack.c.b16 %v577, %v575
    %v712 = vpack.c.b16 %v578, %v576
    %v713 = vpack.c.b16 %v581, %v579
    %v714 = vpack.c.b16 %v582, %v580
    %v715 = vpack.c.b16 %v585, %v583
    %v716 = vpack.c.b16 %v586, %v584
    %v717 = vpack.c.b16 %v589, %v587
    %v718 = vpack.c.b16 %v590, %v588
    %v719 = vpack.c.b16 %v593, %v591
    %v720 = vpack.c.b16 %v594, %v592
    %v721 = vpack.c.b16 %v597, %v595
    %v722 = vpack.c.b16 %v598, %v596
    %v723 = vpack.c.b16 %v601, %v599
    %v724 = vpack.c.b16 %v602, %v600
    %v725 = vpack.c.b16 %v605, %v603
    %v726 = vpack.c.b16 %v606, %v604
    %v727 = vpack.c.b16 %v609, %v607
    %v728 = vpack.c.b16 %v610, %v608
    %v729 = vpack.c.b16 %v613, %v611
    %v730 = vpack.c.b16 %v614, %v612
    %v731 = vpack.c.b16 %v617, %v615
    %v732 = vpack.c.b16 %v618, %v616
    %v733 = vpack.c.b16 %v621, %v619
    %v734 = vpack.c.b16 %v622, %v620
    %847 = vmatpush.bf16.msra.mxu0 %v637
    %848 = vmatpush.bf16.msra.mxu0 %v635
    %849 = vmatpush.bf16.msra.mxu0 %v633
    %850 = vmatpush.bf16.msra.mxu0 %v631
    %851 = vmatpush.bf16.msra.mxu0 %v629
    %852 = vmatpush.bf16.msra.mxu0 %v627
    %853 = vmatpush.bf16.msra.mxu0 %v625
    %854 = vmatpush.bf16.msra.mxu0 %v623
    %855 = vmatmul.bf16.gmra.mxu0 %v273
    %v856 = vpop.f32.mrf.mxu0
    %v857 = vadd.f32 %v247, %v856
    %v858 = vpop.f32.mrf.mxu0
    %v859 = vadd.f32 %v247, %v858
    %860 = vdwg.mxu0
    %861 = vmatpush.bf16.msra.mxu0 %v653
    %862 = vmatpush.bf16.msra.mxu0 %v651
    %863 = vmatpush.bf16.msra.mxu0 %v649
    %864 = vmatpush.bf16.msra.mxu0 %v647
    %865 = vmatpush.bf16.msra.mxu0 %v645
    %866 = vmatpush.bf16.msra.mxu0 %v643
    %867 = vmatpush.bf16.msra.mxu0 %v641
    %868 = vmatpush.bf16.msra.mxu0 %v639
    %869 = vmatmul.bf16.gmra.mxu0 %v274
    %v870 = vpop.f32.mrf.mxu0
    %v871 = vadd.f32 %v857, %v870
    %v872 = vpop.f32.mrf.mxu0
    %v873 = vadd.f32 %v859, %v872
    %874 = vdwg.mxu0
    %875 = vmatpush.bf16.msra.mxu0 %v669
    %876 = vmatpush.bf16.msra.mxu0 %v667
    %877 = vmatpush.bf16.msra.mxu0 %v665
    %878 = vmatpush.bf16.msra.mxu0 %v663
    %879 = vmatpush.bf16.msra.mxu0 %v661
    %880 = vmatpush.bf16.msra.mxu0 %v659
    %881 = vmatpush.bf16.msra.mxu0 %v657
    %882 = vmatpush.bf16.msra.mxu0 %v655
    %883 = vmatmul.bf16.gmra.mxu0 %v275
    %v884 = vpop.f32.mrf.mxu0
    %v885 = vadd.f32 %v871, %v884
    %v886 = vpop.f32.mrf.mxu0
    %v887 = vadd.f32 %v873, %v886
    %888 = vdwg.mxu0
    %889 = vmatpush.bf16.msra.mxu0 %v685
    %890 = vmatpush.bf16.msra.mxu0 %v683
    %891 = vmatpush.bf16.msra.mxu0 %v681
    %892 = vmatpush.bf16.msra.mxu0 %v679
    %893 = vmatpush.bf16.msra.mxu0 %v677
    %894 = vmatpush.bf16.msra.mxu0 %v675
    %895 = vmatpush.bf16.msra.mxu0 %v673
    %896 = vmatpush.bf16.msra.mxu0 %v671
    %897 = vmatmul.bf16.gmra.mxu0 %v276
    %v898 = vpop.f32.mrf.mxu0
    %v899 = vadd.f32 %v885, %v898
    %v900 = vpop.f32.mrf.mxu0
    %v901 = vadd.f32 %v887, %v900
    %902 = vdwg.mxu0
    %903 = vmatpush.bf16.msra.mxu0 %v701
    %904 = vmatpush.bf16.msra.mxu0 %v699
    %905 = vmatpush.bf16.msra.mxu0 %v697
    %906 = vmatpush.bf16.msra.mxu0 %v695
    %907 = vmatpush.bf16.msra.mxu0 %v693
    %908 = vmatpush.bf16.msra.mxu0 %v691
    %909 = vmatpush.bf16.msra.mxu0 %v689
    %910 = vmatpush.bf16.msra.mxu0 %v687
    %911 = vmatmul.bf16.gmra.mxu0 %v277
    %v912 = vpop.f32.mrf.mxu0
    %v913 = vadd.f32 %v899, %v912
    %v914 = vpop.f32.mrf.mxu0
    %v915 = vadd.f32 %v901, %v914
    %916 = vdwg.mxu0
    %917 = vmatpush.bf16.msra.mxu0 %v717
    %918 = vmatpush.bf16.msra.mxu0 %v715
    %919 = vmatpush.bf16.msra.mxu0 %v713
    %920 = vmatpush.bf16.msra.mxu0 %v711
    %921 = vmatpush.bf16.msra.mxu0 %v709
    %922 = vmatpush.bf16.msra.mxu0 %v707
    %923 = vmatpush.bf16.msra.mxu0 %v705
    %924 = vmatpush.bf16.msra.mxu0 %v703
    %925 = vmatmul.bf16.gmra.mxu0 %v278
    %v926 = vpop.f32.mrf.mxu0
    %v927 = vadd.f32 %v913, %v926
    %v928 = vpop.f32.mrf.mxu0
    %v929 = vadd.f32 %v915, %v928
    %930 = vdwg.mxu0
    %931 = vmatpush.bf16.msra.mxu0 %v733
    %932 = vmatpush.bf16.msra.mxu0 %v731
    %933 = vmatpush.bf16.msra.mxu0 %v729
    %934 = vmatpush.bf16.msra.mxu0 %v727
    %935 = vmatpush.bf16.msra.mxu0 %v725
    %936 = vmatpush.bf16.msra.mxu0 %v723
    %937 = vmatpush.bf16.msra.mxu0 %v721
    %938 = vmatpush.bf16.msra.mxu0 %v719
    %939 = vmatmul.bf16.gmra.mxu0 %v279
    %v940 = vpop.f32.mrf.mxu0
    %v941 = vadd.f32 %v927, %v940
    %v942 = vpop.f32.mrf.mxu0
    %v943 = vadd.f32 %v929, %v942
    %944 = vdwg.mxu0
    %945 = vmatpush.bf16.msra.mxu0 %v638
    %946 = vmatpush.bf16.msra.mxu0 %v636
    %947 = vmatpush.bf16.msra.mxu0 %v634
    %948 = vmatpush.bf16.msra.mxu0 %v632
    %949 = vmatpush.bf16.msra.mxu0 %v630
    %950 = vmatpush.bf16.msra.mxu0 %v628
    %951 = vmatpush.bf16.msra.mxu0 %v626
    %952 = vmatpush.bf16.msra.mxu0 %v624
    %953 = vmatmul.bf16.gmra.mxu0 %v273
    %v954 = vpop.f32.mrf.mxu0
    %v955 = vadd.f32 %v248, %v954
    %v956 = vpop.f32.mrf.mxu0
    %v957 = vadd.f32 %v248, %v956
    %958 = vdwg.mxu0
    %959 = vmatpush.bf16.msra.mxu0 %v654
    %960 = vmatpush.bf16.msra.mxu0 %v652
    %961 = vmatpush.bf16.msra.mxu0 %v650
    %962 = vmatpush.bf16.msra.mxu0 %v648
    %963 = vmatpush.bf16.msra.mxu0 %v646
    %964 = vmatpush.bf16.msra.mxu0 %v644
    %965 = vmatpush.bf16.msra.mxu0 %v642
    %966 = vmatpush.bf16.msra.mxu0 %v640
    %967 = vmatmul.bf16.gmra.mxu0 %v274
    %v968 = vpop.f32.mrf.mxu0
    %v969 = vadd.f32 %v955, %v968
    %v970 = vpop.f32.mrf.mxu0
    %v971 = vadd.f32 %v957, %v970
    %972 = vdwg.mxu0
    %973 = vmatpush.bf16.msra.mxu0 %v670
    %974 = vmatpush.bf16.msra.mxu0 %v668
    %975 = vmatpush.bf16.msra.mxu0 %v666
    %976 = vmatpush.bf16.msra.mxu0 %v664
    %977 = vmatpush.bf16.msra.mxu0 %v662
    %978 = vmatpush.bf16.msra.mxu0 %v660
    %979 = vmatpush.bf16.msra.mxu0 %v658
    %980 = vmatpush.bf16.msra.mxu0 %v656
    %981 = vmatmul.bf16.gmra.mxu0 %v275
    %v982 = vpop.f32.mrf.mxu0
    %v983 = vadd.f32 %v969, %v982
    %v984 = vpop.f32.mrf.mxu0
    %v985 = vadd.f32 %v971, %v984
    %986 = vdwg.mxu0
    %987 = vmatpush.bf16.msra.mxu0 %v686
    %988 = vmatpush.bf16.msra.mxu0 %v684
    %989 = vmatpush.bf16.msra.mxu0 %v682
    %990 = vmatpush.bf16.msra.mxu0 %v680
    %991 = vmatpush.bf16.msra.mxu0 %v678
    %992 = vmatpush.bf16.msra.mxu0 %v676
    %993 = vmatpush.bf16.msra.mxu0 %v674
    %994 = vmatpush.bf16.msra.mxu0 %v672
    %995 = vmatmul.bf16.gmra.mxu0 %v276
    %v996 = vpop.f32.mrf.mxu0
    %v997 = vadd.f32 %v983, %v996
    %v998 = vpop.f32.mrf.mxu0
    %v999 = vadd.f32 %v985, %v998
    %1000 = vdwg.mxu0
    %1001 = vmatpush.bf16.msra.mxu0 %v702
    %1002 = vmatpush.bf16.msra.mxu0 %v700
    %1003 = vmatpush.bf16.msra.mxu0 %v698
    %1004 = vmatpush.bf16.msra.mxu0 %v696
    %1005 = vmatpush.bf16.msra.mxu0 %v694
    %1006 = vmatpush.bf16.msra.mxu0 %v692
    %1007 = vmatpush.bf16.msra.mxu0 %v690
    %1008 = vmatpush.bf16.msra.mxu0 %v688
    %1009 = vmatmul.bf16.gmra.mxu0 %v277
    %v1010 = vpop.f32.mrf.mxu0
    %v1011 = vadd.f32 %v997, %v1010
    %v1012 = vpop.f32.mrf.mxu0
    %v1013 = vadd.f32 %v999, %v1012
    %1014 = vdwg.mxu0
    %1015 = vmatpush.bf16.msra.mxu0 %v718
    %1016 = vmatpush.bf16.msra.mxu0 %v716
    %1017 = vmatpush.bf16.msra.mxu0 %v714
    %1018 = vmatpush.bf16.msra.mxu0 %v712
    %1019 = vmatpush.bf16.msra.mxu0 %v710
    %1020 = vmatpush.bf16.msra.mxu0 %v708
    %1021 = vmatpush.bf16.msra.mxu0 %v706
    %1022 = vmatpush.bf16.msra.mxu0 %v704
    %1023 = vmatmul.bf16.gmra.mxu0 %v278
    %v1024 = vpop.f32.mrf.mxu0
    %v1025 = vadd.f32 %v1011, %v1024
    %v1026 = vpop.f32.mrf.mxu0
    %v1027 = vadd.f32 %v1013, %v1026
    %1028 = vdwg.mxu0
    %1029 = vmatpush.bf16.msra.mxu0 %v734
    %1030 = vmatpush.bf16.msra.mxu0 %v732
    %1031 = vmatpush.bf16.msra.mxu0 %v730
    %1032 = vmatpush.bf16.msra.mxu0 %v728
    %1033 = vmatpush.bf16.msra.mxu0 %v726
    %1034 = vmatpush.bf16.msra.mxu0 %v724
    %1035 = vmatpush.bf16.msra.mxu0 %v722
    %1036 = vmatpush.bf16.msra.mxu0 %v720
    %1037 = vmatmul.bf16.gmra.mxu0 %v279
    %v1038 = vpop.f32.mrf.mxu0
    %v1039 = vadd.f32 %v1025, %v1038
    %v1040 = vpop.f32.mrf.mxu0
    %v1041 = vadd.f32 %v1027, %v1040
    %1042 = vdwg.mxu0
    %v1043 = vmax.f32 %v941, 0.0
    %v1044 = vmax.f32 %v1039, 0.0
    %v1045 = vmax.f32 %v943, 0.0
    %v1046 = vmax.f32 %v1041, 0.0
    %v1047 = vpack.c.bf16 %v1045, %v1043
    %v1048 = vpack.c.bf16 %v1046, %v1044
    %v1049 = vld [vmem:[#allocation8] sm:$0xf]
    %v1050 = vld [vmem:[#allocation8 + $0x4] sm:$0xf]
    %v1051 = vld [vmem:[#allocation8 + $0x8] sm:$0xf]
    %v1052 = vld [vmem:[#allocation8 + $0xc] sm:$0xf]
    %v1053 = vld [vmem:[#allocation8 + $0x10] sm:$0xf]
    %v1054 = vld [vmem:[#allocation8 + $0x14] sm:$0xf]
    %v1055 = vld [vmem:[#allocation8 + $0x18] sm:$0xf]
    %v1056 = vld [vmem:[#allocation8 + $0x1c] sm:$0xf]
    %v1057 = vld [vmem:[#allocation8 + $0x20] sm:$0xf]
    %v1058 = vld [vmem:[#allocation8 + $0x24] sm:$0xf]
    %v1059 = vld [vmem:[#allocation8 + $0x28] sm:$0xf]
    %v1060 = vld [vmem:[#allocation8 + $0x2c] sm:$0xf]
    %v1061 = vld [vmem:[#allocation8 + $0x30] sm:$0xf]
    %v1062 = vld [vmem:[#allocation8 + $0x34] sm:$0xf]
    %v1063 = vld [vmem:[#allocation8 + $0x38] sm:$0xf]
    %v1064 = vld [vmem:[#allocation8 + $0x3c] sm:$0xf]
    %v1065 = vld [vmem:[#allocation8 + $0x40] sm:$0xf]
    %v1066 = vld [vmem:[#allocation8 + $0x44] sm:$0xf]
    %v1067 = vld [vmem:[#allocation8 + $0x48] sm:$0xf]
    %v1068 = vld [vmem:[#allocation8 + $0x4c] sm:$0xf]
    %v1069 = vld [vmem:[#allocation8 + $0x50] sm:$0xf]
    %v1070 = vld [vmem:[#allocation8 + $0x54] sm:$0xf]
    %v1071 = vld [vmem:[#allocation8 + $0x58] sm:$0xf]
    %v1072 = vld [vmem:[#allocation8 + $0x5c] sm:$0xf]
    %v1073 = vld [vmem:[#allocation8 + $0x60] sm:$0xf]
    %v1074 = vld [vmem:[#allocation8 + $0x64] sm:$0xf]
    %v1075 = vld [vmem:[#allocation8 + $0x68] sm:$0xf]
    %v1076 = vld [vmem:[#allocation8 + $0x6c] sm:$0xf]
    %v1077 = vld [vmem:[#allocation8 + $0x70] sm:$0xf]
    %v1078 = vld [vmem:[#allocation8 + $0x74] sm:$0xf]
    %v1079 = vld [vmem:[#allocation8 + $0x78] sm:$0xf]
    %v1080 = vld [vmem:[#allocation8 + $0x7c] sm:$0xf]
    %v1081 = vld [vmem:[%s4] sm:$0x1]
    %v1083 = vperm.slane %v1081, 0
    %v1117 = vunpack.c.l.b16 %v1049
    %v1118 = vunpack.c.l.b16 %v1050
    %v1119 = vunpack.c.l.b16 %v1051
    %v1120 = vunpack.c.l.b16 %v1052
    %v1121 = vunpack.c.l.b16 %v1053
    %v1122 = vunpack.c.l.b16 %v1054
    %v1123 = vunpack.c.l.b16 %v1055
    %v1124 = vunpack.c.l.b16 %v1056
    %v1125 = vunpack.c.l.b16 %v1057
    %v1126 = vunpack.c.l.b16 %v1058
    %v1127 = vunpack.c.l.b16 %v1059
    %v1128 = vunpack.c.l.b16 %v1060
    %v1129 = vunpack.c.l.b16 %v1061
    %v1130 = vunpack.c.l.b16 %v1062
    %v1131 = vunpack.c.l.b16 %v1063
    %v1132 = vunpack.c.l.b16 %v1064
    %v1133 = vunpack.c.l.b16 %v1065
    %v1134 = vunpack.c.l.b16 %v1066
    %v1135 = vunpack.c.l.b16 %v1067
    %v1136 = vunpack.c.l.b16 %v1068
    %v1137 = vunpack.c.l.b16 %v1069
    %v1138 = vunpack.c.l.b16 %v1070
    %v1139 = vunpack.c.l.b16 %v1071
    %v1140 = vunpack.c.l.b16 %v1072
    %v1141 = vunpack.c.l.b16 %v1073
    %v1142 = vunpack.c.l.b16 %v1074
    %v1143 = vunpack.c.l.b16 %v1075
    %v1144 = vunpack.c.l.b16 %v1076
    %v1145 = vunpack.c.l.b16 %v1077
    %v1146 = vunpack.c.l.b16 %v1078
    %v1147 = vunpack.c.l.b16 %v1079
    %v1148 = vunpack.c.l.b16 %v1080
    %v1149 = vpack.c.b16 %v1118, %v1117
    %v1150 = vpack.c.b16 %v1120, %v1119
    %v1151 = vpack.c.b16 %v1122, %v1121
    %v1152 = vpack.c.b16 %v1124, %v1123
    %v1153 = vpack.c.b16 %v1126, %v1125
    %v1154 = vpack.c.b16 %v1128, %v1127
    %v1155 = vpack.c.b16 %v1130, %v1129
    %v1156 = vpack.c.b16 %v1132, %v1131
    %v1157 = vpack.c.b16 %v1134, %v1133
    %v1158 = vpack.c.b16 %v1136, %v1135
    %v1159 = vpack.c.b16 %v1138, %v1137
    %v1160 = vpack.c.b16 %v1140, %v1139
    %v1161 = vpack.c.b16 %v1142, %v1141
    %v1162 = vpack.c.b16 %v1144, %v1143
    %v1163 = vpack.c.b16 %v1146, %v1145
    %v1164 = vpack.c.b16 %v1148, %v1147
    %1181 = vmatpush.bf16.msra.mxu0 %v1156
    %1182 = vmatpush.bf16.msra.mxu0 %v1155
    %1183 = vmatpush.bf16.msra.mxu0 %v1154
    %1184 = vmatpush.bf16.msra.mxu0 %v1153
    %1185 = vmatpush.bf16.msra.mxu0 %v1152
    %1186 = vmatpush.bf16.msra.mxu0 %v1151
    %1187 = vmatpush.bf16.msra.mxu0 %v1150
    %1188 = vmatpush.bf16.msra.mxu0 %v1149
    %1189 = vmatmul.bf16.gmra.mxu0 %v1047
    %v1190 = vpop.f32.mrf.mxu0
    %v1191 = vadd.f32 %v1083, %v1190
    %v1192 = vpop.f32.mrf.mxu0
    %v1193 = vadd.f32 %v1083, %v1192
    %1194 = vdwg.mxu0
    %1195 = vmatpush.bf16.msra.mxu0 %v1164
    %1196 = vmatpush.bf16.msra.mxu0 %v1163
    %1197 = vmatpush.bf16.msra.mxu0 %v1162
    %1198 = vmatpush.bf16.msra.mxu0 %v1161
    %1199 = vmatpush.bf16.msra.mxu0 %v1160
    %1200 = vmatpush.bf16.msra.mxu0 %v1159
    %1201 = vmatpush.bf16.msra.mxu0 %v1158
    %1202 = vmatpush.bf16.msra.mxu0 %v1157
    %1203 = vmatmul.bf16.gmra.mxu0 %v1048
    %v1204 = vpop.f32.mrf.mxu0
    %v1205 = vadd.f32 %v1191, %v1204
    %v1206 = vpop.f32.mrf.mxu0
    %v1207 = vadd.f32 %v1193, %v1206
    %1208 = vdwg.mxu0
    %v1209 = vmax.f32 %v1205, 0.0
    %v1210 = vmax.f32 %v1207, 0.0
    %v1211 = vpack.c.bf16 %v1210, %v1209
    %v1212 = vld [vmem:[#allocation10] sm:$0xf]
    %v1213 = vld [vmem:[#allocation10 + $0x4] sm:$0xf]
    %v1214 = vld [vmem:[#allocation10 + $0x8] sm:$0xf]
    %v1215 = vld [vmem:[#allocation10 + $0xc] sm:$0xf]
    %v1216 = vld [vmem:[#allocation10 + $0x10] sm:$0xf]
    %v1217 = vld [vmem:[#allocation10 + $0x14] sm:$0xf]
    %v1218 = vld [vmem:[#allocation10 + $0x18] sm:$0xf]
    %v1219 = vld [vmem:[#allocation10 + $0x1c] sm:$0xf]
    %v1220 = vld [vmem:[#allocation10 + $0x20] sm:$0xf]
    %v1221 = vld [vmem:[#allocation10 + $0x24] sm:$0xf]
    %v1222 = vld [vmem:[#allocation10 + $0x28] sm:$0xf]
    %v1223 = vld [vmem:[#allocation10 + $0x2c] sm:$0xf]
    %v1224 = vld [vmem:[#allocation10 + $0x30] sm:$0xf]
    %v1225 = vld [vmem:[#allocation10 + $0x34] sm:$0xf]
    %v1226 = vld [vmem:[#allocation10 + $0x38] sm:$0xf]
    %v1227 = vld [vmem:[#allocation10 + $0x3c] sm:$0xf]
    %v1228 = vld [vmem:[%s6] sm:$0x1]
    %v1230 = vperm.slane %v1228, 0
    %v1248 = vunpack.c.l.b16 %v1212
    %v1249 = vunpack.c.l.b16 %v1213
    %v1250 = vunpack.c.l.b16 %v1214
    %v1251 = vunpack.c.l.b16 %v1215
    %v1252 = vunpack.c.l.b16 %v1216
    %v1253 = vunpack.c.l.b16 %v1217
    %v1254 = vunpack.c.l.b16 %v1218
    %v1255 = vunpack.c.l.b16 %v1219
    %v1256 = vunpack.c.l.b16 %v1220
    %v1257 = vunpack.c.l.b16 %v1221
    %v1258 = vunpack.c.l.b16 %v1222
    %v1259 = vunpack.c.l.b16 %v1223
    %v1260 = vunpack.c.l.b16 %v1224
    %v1261 = vunpack.c.l.b16 %v1225
    %v1262 = vunpack.c.l.b16 %v1226
    %v1263 = vunpack.c.l.b16 %v1227
    %v1264 = vpack.c.b16 %v1249, %v1248
    %v1265 = vpack.c.b16 %v1251, %v1250
    %v1266 = vpack.c.b16 %v1253, %v1252
    %v1267 = vpack.c.b16 %v1255, %v1254
    %v1268 = vpack.c.b16 %v1257, %v1256
    %v1269 = vpack.c.b16 %v1259, %v1258
    %v1270 = vpack.c.b16 %v1261, %v1260
    %v1271 = vpack.c.b16 %v1263, %v1262
    %1280 = vmatpush.bf16.msra.mxu0 %v1271
    %1281 = vmatpush.bf16.msra.mxu0 %v1270
    %1282 = vmatpush.bf16.msra.mxu0 %v1269
    %1283 = vmatpush.bf16.msra.mxu0 %v1268
    %1284 = vmatpush.bf16.msra.mxu0 %v1267
    %1285 = vmatpush.bf16.msra.mxu0 %v1266
    %1286 = vmatpush.bf16.msra.mxu0 %v1265
    %1287 = vmatpush.bf16.msra.mxu0 %v1264
    %1288 = vmatmul.bf16.gmra.mxu0 %v1211
    %v1289 = vpop.f32.mrf.mxu0
    %v1290 = vadd.f32 %v1230, %v1289
    %v1291 = vpop.f32.mrf.mxu0
    %v1292 = vadd.f32 %v1230, %v1291
    %1293 = vdwg.mxu0
    %v1294 = vmax.f32 %v1290, 0.0
    %v1295 = vmax.f32 %v1292, 0.0
    %v1296 = vpack.c.bf16 %v1295, %v1294
    %v1297 = vld [vmem:[#allocation11] sm:$0xf]
    %v1298 = vld [vmem:[#allocation11 + $0x4] sm:$0xf]
    %v1299 = vld [vmem:[#allocation11 + $0x8] sm:$0xf]
    %v1300 = vld [vmem:[#allocation11 + $0xc] sm:$0xf]
    %v1301 = vld [vmem:[#allocation11 + $0x10] sm:$0xf]
    %v1302 = vld [vmem:[#allocation11 + $0x14] sm:$0xf]
    %v1303 = vld [vmem:[#allocation11 + $0x18] sm:$0xf]
    %v1304 = vld [vmem:[#allocation11 + $0x1c] sm:$0xf]
    %v1305 = vld [vmem:[#allocation11 + $0x20] sm:$0xf]
    %v1306 = vld [vmem:[#allocation11 + $0x24] sm:$0xf]
    %v1307 = vld [vmem:[#allocation11 + $0x28] sm:$0xf]
    %v1308 = vld [vmem:[#allocation11 + $0x2c] sm:$0xf]
    %v1309 = vld [vmem:[#allocation11 + $0x30] sm:$0xf]
    %v1310 = vld [vmem:[#allocation11 + $0x34] sm:$0xf]
    %v1311 = vld [vmem:[#allocation11 + $0x38] sm:$0xf]
    %v1312 = vld [vmem:[#allocation11 + $0x3c] sm:$0xf]
    %v1313 = vld [vmem:[%s8] sm:$0x1]
    %v1315 = vperm.slane %v1313, 0
    %v1333 = vunpack.c.l.b16 %v1297
    %v1334 = vunpack.c.l.b16 %v1298
    %v1335 = vunpack.c.l.b16 %v1299
    %v1336 = vunpack.c.l.b16 %v1300
    %v1337 = vunpack.c.l.b16 %v1301
    %v1338 = vunpack.c.l.b16 %v1302
    %v1339 = vunpack.c.l.b16 %v1303
    %v1340 = vunpack.c.l.b16 %v1304
    %v1341 = vunpack.c.l.b16 %v1305
    %v1342 = vunpack.c.l.b16 %v1306
    %v1343 = vunpack.c.l.b16 %v1307
    %v1344 = vunpack.c.l.b16 %v1308
    %v1345 = vunpack.c.l.b16 %v1309
    %v1346 = vunpack.c.l.b16 %v1310
    %v1347 = vunpack.c.l.b16 %v1311
    %v1348 = vunpack.c.l.b16 %v1312
    %v1349 = vpack.c.b16 %v1334, %v1333
    %v1350 = vpack.c.b16 %v1336, %v1335
    %v1351 = vpack.c.b16 %v1338, %v1337
    %v1352 = vpack.c.b16 %v1340, %v1339
    %v1353 = vpack.c.b16 %v1342, %v1341
    %v1354 = vpack.c.b16 %v1344, %v1343
    %v1355 = vpack.c.b16 %v1346, %v1345
    %v1356 = vpack.c.b16 %v1348, %v1347
    %1365 = vmatpush.bf16.msra.mxu0 %v1356
    %1366 = vmatpush.bf16.msra.mxu0 %v1355
    %1367 = vmatpush.bf16.msra.mxu0 %v1354
    %1368 = vmatpush.bf16.msra.mxu0 %v1353
    %1369 = vmatpush.bf16.msra.mxu0 %v1352
    %1370 = vmatpush.bf16.msra.mxu0 %v1351
    %1371 = vmatpush.bf16.msra.mxu0 %v1350
    %1372 = vmatpush.bf16.msra.mxu0 %v1349
    %1373 = vmatmul.bf16.gmra.mxu0 %v1296
    %v1374 = vpop.f32.mrf.mxu0
    %v1375 = vadd.f32 %v1315, %v1374
    %v1376 = vpop.f32.mrf.mxu0
    %v1377 = vadd.f32 %v1315, %v1376
    %1378 = vdwg.mxu0
    %v1379 = vlaneseq
    %v1380 = vand.u32 %v1379, 127
    %vm1381 = vcmp.lt.s32.totalorder %v1380, 10
    %v1382 = vsel %vm1381, %v1375, -inf
    %v1383 = vsel %vm1381, %v1377, -inf
    %1384 = vmax.xlane.f32.xlu0 %v1382
    %v1385 = vpop.xlane.xlu0 %1384
    %1386 = vmax.xlane.f32.xlu0 %v1383
    %v1387 = vpop.xlane.xlu0 %1386
    %v1388 = vsub.f32 %v1382, %v1385
    %v1389 = vsub.f32 %v1383, %v1387
    %v1390 = vmul.f32 %v1388, 1.442695
    %v1391 = vpow.pop %v1390
    %v1392 = vmul.f32 %v1389, 1.442695
    %v1393 = vpow.pop %v1392
    %1394 = vadd.xlane.f32.xlu0 %v1391
    %v1395 = vpop.xlane.xlu0 %1394
    %1396 = vadd.xlane.f32.xlu0 %v1393
    %v1397 = vpop.xlane.xlu0 %1396
    %v1398 = vlog2.pop %v1395
    %v1399 = vmul.f32 %v1398, 0.6931472
    %v1400 = vlog2.pop %v1397
    %v1401 = vmul.f32 %v1400, 0.6931472
    %v1402 = vsub.f32 %v1388, %v1399
    %v1403 = vsub.f32 %v1389, %v1401
    %1404 = vst [vmem:[#allocation13] sm:$0xff] %v1402
    %1405 = vst [vmem:[#allocation13 + $0x8] sm:$0xff] %v1403
    // Predicated region
    $region62: #{tpu_custom_call.1} parent=1 // pred_check
      _
    $region63: #{tpu_custom_call.1} parent=1 // pred_check_branch
      %1407 = sbr.rel (0) target = $region65
    $region64: #{tpu_custom_call.1} parent=1 // pred_region
      %1409 = vsyncadd [#allocation4], 0
      %s1410 = sshll.u32 [#allocation13], 4
      %s1411 = int_to_ptr.vmem [resolvable:$true] %s1410
      %s1412 = sshll.u32 %s9, 4
      %s1413 = int_to_ptr.hbm [resolvable:$true] %s1412
      %1418 = dma.vmem_to_hbm [thread:$0]  %s1411, 256, %s1413, [#allocation4], 128, 128, 8
    $region65: #{tpu_custom_call.1} parent=1 // pred_fallthru
      _
    // Predicated region
    $region66: #{tpu_custom_call.1} parent=1 // pred_check
      _
    $region67: #{tpu_custom_call.1} parent=1 // pred_check_branch
      %1420 = sbr.rel (0) target = $region69
    $region68: #{tpu_custom_call.1} parent=1 // pred_region
      %1422 = dma.done [#allocation4], 256
    $region69: #{tpu_custom_call.1} parent=1 // pred_fallthru
      _
    %1423 = vsyncpa [#allocation3], 1
    %1424 = vsyncpa [#allocation6], 1
    %1425 = vsyncpa [#allocation9], 1
    %1426 = vsyncpa [#allocation12], 1
    %1427 = vsyncpa [#allocation4], 1

</llo_original>
